<compile_context>
chip_gen: v6e
topology: v6e:2x2x1
jax: 0.10.0
libtpu: 0.0.40
codegen_flags: <defaults>
</compile_context>

<pallas_src>
import functools

import jax
import jax.numpy as jnp
from jax.experimental import pallas as pl
from jax.experimental.pallas import tpu as pltpu

# Well under v7x's 64 MiB physical VMEM, comfortably above v5e's 16 MiB
# scoped default so the larger tiles are not rejected there.
_VMEM_LIMIT_BYTES = 48 * 1024 * 1024

# Below this many MACs a grid kernel is pure fixed overhead; XLA wins outright.
_SMALL_PROBLEM_MACS = 1 << 22


def _pick_tile(dim, candidates):
    """Largest candidate that evenly divides `dim`, else the full dim."""
    for c in candidates:
        if dim % c == 0:
            return c
    return dim


def _round_up(x, m):
    return ((x + m - 1) // m) * m


def prepare_linear_params(w, b, param_dtype=None):
    """Parameter-load-time prep (done once, not per forward call):
    transpose the torch-style (N, K) weight; optionally store it as bfloat16
    (f32 accumulation is kept in-kernel) for ~3x MXU throughput and half the
    weight DMA on v6e/v7x."""
    w_t = jnp.transpose(w)
    if param_dtype is not None:
        w_t = w_t.astype(param_dtype)
    return w_t, b.reshape(1, -1).astype(jnp.float32)


# ---------------------------------------------------------------------------
# Path B: lane-dense (M, N) projection.  Used when head_dim % 128 != 0.
# Single copy written; duplication + head transpose are fused downstream by
# XLA into one broadcast+transpose pass.
# ---------------------------------------------------------------------------
def _proj_kernel(x_ref, w_ref, b_ref, o_ref):
    # x_ref: (TM, TK)  w_ref: (TK, TN)  b_ref: (1, TN)  o_ref: (TM, TN) f32
    # The output block index ignores k -> the tile is VMEM-resident across the
    # K axis, so accumulate directly into it (no scratch, no finalize copy).
    k = pl.program_id(2)

    @pl.when(k == 0)
    def _():
        o_ref[...] = jnp.zeros_like(o_ref)

    xv = x_ref[...]
    wv = w_ref[...]
    if xv.dtype != wv.dtype:          # optional bf16 weight fast path
        xv = xv.astype(wv.dtype)
    o_ref[...] += jnp.dot(xv, wv, preferred_element_type=jnp.float32)

    @pl.when(k == pl.num_programs(2) - 1)
    def _():
        o_ref[...] += b_ref[...]


def linear_pallas(x2d, w_t, b2d):
    """y = x2d @ w_t + b, returned as (M, N) float32."""
    M, K = x2d.shape
    N = w_t.shape[1]

    tm = _pick_tile(M, (512, 256, 128, 64, 32, 16, 8))
    m_pad = M
    if tm == M and M > 1024:
        # Huge awkward M: fall back to padding.  Never hit for this model
        # (M = B*S <= 128 per its dynamic-shape spec).
        tm = 256
        m_pad = _round_up(M, tm)
        x2d = jnp.pad(x2d, ((0, m_pad - M), (0, 0)))
    tn = _pick_tile(N, (512, 256, 128))
    tk = _pick_tile(K, (1024, 512, 256, 128))

    grid = (m_pad // tm, N // tn, K // tk)   # reduction (K) axis last

    out = pl.pallas_call(
        _proj_kernel,
        out_shape=jax.ShapeDtypeStruct((m_pad, N), jnp.float32),
        grid=grid,
        in_specs=[
            pl.BlockSpec((tm, tk), lambda i, j, k: (i, k)),
            pl.BlockSpec((tk, tn), lambda i, j, k: (k, j)),
            pl.BlockSpec((1, tn), lambda i, j, k: (0, j)),
        ],
        out_specs=pl.BlockSpec((tm, tn), lambda i, j, k: (i, j)),
        compiler_params=pltpu.CompilerParams(
            dimension_semantics=("parallel", "parallel", "arbitrary"),
            vmem_limit_bytes=_VMEM_LIMIT_BYTES),
    )(x2d, w_t, b2d)

    if m_pad != M:
        out = out[:M]
    return out


# ---------------------------------------------------------------------------
# Path A: fused projection + head-split + transpose + 2x duplication.
# Used when head_dim % 128 == 0: the kernel emits (B, 2, H, S, D) directly,
# removing the separate XLA transpose pass over 2*M*N elements entirely.
# ---------------------------------------------------------------------------
def _proj_heads_dup_kernel(x_ref, w_ref, b_ref, o_ref, acc_ref, *, hb, hd):
    # x_ref: (1, TS, TK)  w_ref: (TK, hb*D)  b_ref: (1, hb*D)
    # o_ref: (1, 2, hb, TS, D)  acc_ref: (TS, hb*D) f32
    k = pl.program_id(3)

    @pl.when(k == 0)
    def _():
        acc_ref[...] = jnp.zeros_like(acc_ref)

    xv = x_ref[0]
    wv = w_ref[...]
    if xv.dtype != wv.dtype:          # optional bf16 weight fast path
        xv = xv.astype(wv.dtype)
    acc_ref[...] += jnp.dot(xv, wv, preferred_element_type=jnp.float32)

    @pl.when(k == pl.num_programs(3) - 1)
    def _():
        y = (acc_ref[...] + b_ref[...]).astype(o_ref.dtype)   # (TS, hb*D)
        for hl in range(hb):                                   # static unroll
            blk = y[:, hl * hd:(hl + 1) * hd]                  # lane-aligned
            o_ref[0, 0, hl] = blk
            o_ref[0, 1, hl] = blk


def proj_heads_dup_pallas(x, w_t, b2d, num_heads):
    B, S, K = x.shape
    N = w_t.shape[1]
    H = num_heads
    D = N // H
    assert D % 128 == 0 and H * D == N

    ts = _pick_tile(S, (512, 256, 128, 64, 32, 16, 8))
    tk = _pick_tile(K, (1024, 512, 256, 128))
    # Heads per block: keep the matmul N-width at 256-512 to feed the full
    # 256-wide MXU on v6e/v7x.  Heads are contiguous along N so the w block
    # stays a plain rectangular slice.
    hb = 1
    for cand in (4, 2, 1):
        if H % cand == 0 and cand * D <= 512:
            hb = cand
            break
    tn = hb * D

    grid = (B, S // ts, H // hb, K // tk)   # reduction (K) axis last

    kernel = functools.partial(_proj_heads_dup_kernel, hb=hb, hd=D)

    return pl.pallas_call(
        kernel,
        out_shape=jax.ShapeDtypeStruct((B, 2, H, S, D), jnp.float32),
        grid=grid,
        in_specs=[
            pl.BlockSpec((1, ts, tk), lambda b, si, h0, k: (b, si, k)),
            pl.BlockSpec((tk, tn), lambda b, si, h0, k: (k, h0)),
            pl.BlockSpec((1, tn), lambda b, si, h0, k: (0, h0)),
        ],
        out_specs=pl.BlockSpec((1, 2, hb, ts, D),
                               lambda b, si, h0, k: (b, 0, h0, si, 0)),
        scratch_shapes=[pltpu.VMEM((ts, tn), jnp.float32)],
        compiler_params=pltpu.CompilerParams(
            dimension_semantics=("parallel", "parallel", "parallel",
                                 "arbitrary"),
            vmem_limit_bytes=_VMEM_LIMIT_BYTES),
    )(x, w_t, b2d)


# ---------------------------------------------------------------------------
# Forward
# ---------------------------------------------------------------------------
@functools.partial(jax.jit, static_argnames=("num_heads", "force_pallas"))
def counter_example_forward(x, w_t, b2d, num_heads, force_pallas=False):
    """Reproduces CounterExampleModel.forward (returns features_case1)."""
    B, S, K = x.shape
    N = w_t.shape[1]
    H = num_heads
    D = N // H

    # Tiny problems: a single-step grid kernel is pure fixed overhead.
    if (B * S) * N * K < _SMALL_PROBLEM_MACS and not force_pallas:
        y = jnp.einsum("bsk,kn->bsn", x, w_t.astype(x.dtype)) + b2d
        feats = jnp.transpose(y.reshape(B, S, H, D), (0, 2, 1, 3))
        out = jnp.broadcast_to(feats[:, None], (B, 2, H, S, D))
        return out.reshape(B, 2 * H, S, D)

    if D % 128 == 0:
        # Fully fused: kernel writes (B, 2, H, S, D); reshape below is a view.
        out5 = proj_heads_dup_pallas(x, w_t, b2d, num_heads)
        return out5.reshape(B, 2 * H, S, D)

    # Lane-dense path (head_dim < 128): single-copy kernel output; duplication
    # rides inside the (unavoidable) broadcast+transpose pass that XLA fuses.
    y = linear_pallas(x.reshape(B * S, K), w_t, b2d)            # (M, N) f32
    feats = jnp.transpose(y.reshape(B, S, H, D), (0, 2, 1, 3))  # (B, H, S, D)
    out = jnp.broadcast_to(feats[:, None], (B, 2, H, S, D))
    return out.reshape(B, 2 * H, S, D)
    # TODO(synk): the features_case2 branch of the PyTorch module is dead code
    # (never returned), so it is intentionally not implemented.


# ---------------------------------------------------------------------------
# Demo / self-check
# ---------------------------------------------------------------------------
def _reference_forward(x, w, b, num_heads):
    """Pure-JAX reference (torch-layout weight (N, K))."""
    B, S, _ = x.shape
    N = w.shape[0]
    D = N // num_heads
    y = jnp.einsum("bsk,nk->bsn", x, w,
                   precision=jax.lax.Precision.HIGHEST) + b
    feats = jnp.transpose(y.reshape(B, S, num_heads, D), (0, 2, 1, 3))
    out = jnp.broadcast_to(feats[:, None], (B, 2, num_heads, S, D))
    return out.reshape(B, 2 * num_heads, S, D)


def _run_case(key, B, S, hidden, num_heads):
    D = hidden // num_heads
    N = num_heads * D
    kx, kw, kb = jax.random.split(key, 3)
    # Quantize inputs to bf16-representable f32 so the MXU's bf16 product path
    # is exact and the check is insensitive to matmul precision modes.
    q = lambda a: a.astype(jnp.bfloat16).astype(jnp.float32)
    x = q(jax.random.normal(kx, (B, S, hidden), jnp.float32))
    w = q(jax.random.normal(kw, (N, hidden), jnp.float32) * 0.05)
    b = q(jax.random.normal(kb, (N,), jnp.float32) * 0.01)

    w_t, b2d = prepare_linear_params(w, b)           # done at "load" time
    out = counter_example_forward(x, w_t, b2d, num_heads, force_pallas=True)
    out = jax.block_until_ready(out)

    ref = _reference_forward(x, w, b, num_heads)
    assert out.shape == (B, 2 * num_heads, S, D), out.shape
    assert jnp.allclose(out, ref, atol=1e-4, rtol=1e-4), (
        float(jnp.max(jnp.abs(out - ref))))
    return out


if __name__ == "__main__":
    key = jax.random.PRNGKey(0)
    k1, k2 = jax.random.split(key)

    # Primary small shape from the test spec (head_dim = 8 -> lane-dense path).
    _run_case(k1, B=2, S=8, hidden=32, num_heads=4)

    # head_dim = 128 -> fully fused (B, 2, H, S, D) kernel path.
    _run_case(k2, B=2, S=16, hidden=512, num_heads=4)

    print("KERNEL_OK")
</pallas_src>

<mosaic_0001>
module attributes {stable_mosaic.version = 11 : i64} {
  func.func @_proj_kernel(%arg0: i32, %arg1: i32, %arg2: i32, %arg3: memref<16x32xf32, #tpu.memory_space<vmem>>, %arg4: memref<32x32xf32, #tpu.memory_space<vmem>>, %arg5: memref<1x32xf32, #tpu.memory_space<vmem>>, %arg6: memref<16x32xf32, #tpu.memory_space<vmem>>) attributes {dimension_semantics = [#tpu.dimension_semantics<parallel>, #tpu.dimension_semantics<parallel>, #tpu.dimension_semantics<arbitrary>], iteration_bounds = array<i64: 1, 1, 1>, scalar_prefetch = 0 : i64, scratch_operands = 0 : i64, tpu.core_type = #tpu.core_type<tc>, window_params = [{transform_indices = @transform_0, window_bounds = array<i64: 16, 32>}, {transform_indices = @transform_1, window_bounds = array<i64: 32, 32>}, {transform_indices = @transform_2, window_bounds = array<i64: 1, 32>}, {transform_indices = @transform_3, window_bounds = array<i64: 16, 32>}]} {
    %c0_i32 = arith.constant 0 : i32
    %0 = arith.cmpi eq, %arg2, %c0_i32 : i32
    %1 = arith.extui %0 : i1 to i32
    %c0_i32_0 = arith.constant 0 : i32
    %2 = arith.cmpi ne, %1, %c0_i32_0 : i32
    scf.if %2 {
      %cst_10 = arith.constant 0.000000e+00 : f32
      %12 = vector.broadcast %cst_10 : f32 to vector<16x32xf32>
      %c0_11 = arith.constant 0 : index
      %c0_12 = arith.constant 0 : index
      %13 = vector.load %arg6[%c0_11, %c0_12] : memref<16x32xf32, #tpu.memory_space<vmem>>, vector<16x32xf32>
      tpu.vector_store %arg6[%c0_11, %c0_12], %12 {strides = array<i32>} : memref<16x32xf32, #tpu.memory_space<vmem>>, vector<16x32xf32>,
    } else {
    }
    %c0 = arith.constant 0 : index
    %c0_1 = arith.constant 0 : index
    %3 = vector.load %arg3[%c0, %c0_1] : memref<16x32xf32, #tpu.memory_space<vmem>>, vector<16x32xf32>
    %c0_2 = arith.constant 0 : index
    %c0_3 = arith.constant 0 : index
    %4 = vector.load %arg4[%c0_2, %c0_3] : memref<32x32xf32, #tpu.memory_space<vmem>>, vector<32x32xf32>
    %c0_4 = arith.constant 0 : index
    %c0_5 = arith.constant 0 : index
    %5 = vector.load %arg6[%c0_4, %c0_5] : memref<16x32xf32, #tpu.memory_space<vmem>>, vector<16x32xf32>
    %cst = arith.constant dense<0.000000e+00> : vector<16x32xf32>
    %6 = tpu.matmul %3, %4, %cst {dimension_numbers = #tpu.dot_dimension_numbers<[1], [0], [0], [1], [0, 0, 1, 1], [], []>} : vector<16x32xf32>, vector<32x32xf32>, vector<16x32xf32> -> vector<16x32xf32>
    %7 = arith.addf %5, %6 : vector<16x32xf32>
    %c0_6 = arith.constant 0 : index
    %c0_7 = arith.constant 0 : index
    %8 = vector.load %arg6[%c0_6, %c0_7] : memref<16x32xf32, #tpu.memory_space<vmem>>, vector<16x32xf32>
    tpu.vector_store %arg6[%c0_6, %c0_7], %7 {strides = array<i32>} : memref<16x32xf32, #tpu.memory_space<vmem>>, vector<16x32xf32>,
    %c0_i32_8 = arith.constant 0 : i32
    %9 = arith.cmpi eq, %arg2, %c0_i32_8 : i32
    %10 = arith.extui %9 : i1 to i32
    %c0_i32_9 = arith.constant 0 : i32
    %11 = arith.cmpi ne, %10, %c0_i32_9 : i32
    scf.if %11 {
      %c0_10 = arith.constant 0 : index
      %c0_11 = arith.constant 0 : index
      %12 = vector.load %arg6[%c0_10, %c0_11] : memref<16x32xf32, #tpu.memory_space<vmem>>, vector<16x32xf32>
      %c0_12 = arith.constant 0 : index
      %c0_13 = arith.constant 0 : index
      %13 = vector.load %arg5[%c0_12, %c0_13] : memref<1x32xf32, #tpu.memory_space<vmem>>, vector<1x32xf32>
      %14 = vector.broadcast %13 : vector<1x32xf32> to vector<16x32xf32>
      %15 = arith.addf %12, %14 : vector<16x32xf32>
      %c0_14 = arith.constant 0 : index
      %c0_15 = arith.constant 0 : index
      %16 = vector.load %arg6[%c0_14, %c0_15] : memref<16x32xf32, #tpu.memory_space<vmem>>, vector<16x32xf32>
      tpu.vector_store %arg6[%c0_14, %c0_15], %15 {strides = array<i32>} : memref<16x32xf32, #tpu.memory_space<vmem>>, vector<16x32xf32>,
    } else {
    }
    return
  }
  func.func @transform_0(%arg0: i32, %arg1: i32, %arg2: i32) -> (i32, i32) {
    %c0_i32 = arith.constant 0 : i32
    return %arg0, %arg2 : i32, i32
  }
  func.func @transform_1(%arg0: i32, %arg1: i32, %arg2: i32) -> (i32, i32) {
    %c0_i32 = arith.constant 0 : i32
    return %arg2, %arg1 : i32, i32
  }
  func.func @transform_2(%arg0: i32, %arg1: i32, %arg2: i32) -> (i32, i32) {
    %c0_i32 = arith.constant 0 : i32
    %c0_i32_0 = arith.constant 0 : i32
    return %c0_i32, %arg1 : i32, i32
  }
  func.func @transform_3(%arg0: i32, %arg1: i32, %arg2: i32) -> (i32, i32) {
    %c0_i32 = arith.constant 0 : i32
    return %arg0, %arg1 : i32, i32
  }
}

</mosaic_0001>

<llo_original>
// kernel: counter_example_forward.1
$region0: #{counter_example_forward.1}
  #allocation0 [shape = 'u32[]', space=smem, size = 0x4, offset = 0x4, fixed_abs, tag = 'smem constant byte address 0x4 - core index']
  #allocation1 [shape = 'u32[144,128]{1,0:T(1,128)}', space=vmem, size = 0x12000, scoped, tag = 'internal scratch']
  %s0 = inlined_call_operand.hbm [shape: f32[16,32], index: 0, kind: input, shape index: {}]
  %s1 = inlined_call_operand.hbm [shape: f32[32,32], index: 1, kind: input, shape index: {}]
  %s2 = inlined_call_operand.vmem [shape: f32[1,32], index: 2, kind: input, shape index: {}]
  %s3 = inlined_call_operand.vmem [shape: f32[16,32], index: 3, kind: output, shape index: {}]
  %s4 = sld [smem:[#allocation0]]
  $region38: #{counter_example_forward.1} parent=0
    _
  %s6 = ssub.s32 1, %s4
  %s7 = scalar_select 0, %s6, %s4
  $region1: #{counter_example_forward.1} parent=0
    #allocation2 [shape = 'u8[8192]{0}', space=vmem, size = 0x2000, scoped, tag = 'input window, operand 0, single buffered']
    #allocation3 [shape = 's32[1]{0}', space=sflag, size = 0x4, scoped, tag = 'scoped memory for counter_example_forward.1']
    #allocation4 [shape = 'u8[16384]{0}', space=vmem, size = 0x4000, scoped, tag = 'input window, operand 1, single buffered']
    #allocation5 [shape = 's32[1]{0}', space=sflag, size = 0x4, scoped, tag = 'scoped memory for counter_example_forward.1']
    %8 = vsyncpa [#allocation3], 0
    %9 = vsyncpa [#allocation5], 0
    // Predicated region
    $region2: #{counter_example_forward.1} parent=1 // pred_check
      _
    $region3: #{counter_example_forward.1} parent=1 // pred_check_branch
      %11 = sbr.rel (0) target = $region5
    $region4: #{counter_example_forward.1} parent=1 // pred_region
      %s13 = ssub.s32 256, 256
      %14 = vsyncadd [#allocation3], %s13
      %s15 = sshll.u32 [#allocation2], 4
      %s16 = int_to_ptr.vmem [resolvable:$true] %s15
      %21 = dma.hbm_to_vmem [thread:$0]  %s0, 256, %s16, [#allocation3], 128, 128, 8
    $region5: #{counter_example_forward.1} parent=1 // pred_fallthru
      _
    // Predicated region
    $region6: #{counter_example_forward.1} parent=1 // pred_check
      _
    $region7: #{counter_example_forward.1} parent=1 // pred_check_branch
      %23 = sbr.rel (0) target = $region9
    $region8: #{counter_example_forward.1} parent=1 // pred_region
      %s25 = ssub.s32 512, 512
      %26 = vsyncadd [#allocation5], %s25
      %s27 = sshll.u32 [#allocation4], 4
      %s28 = int_to_ptr.vmem [resolvable:$true] %s27
      %33 = dma.hbm_to_vmem [thread:$0]  %s1, 512, %s28, [#allocation5], 128, 128, 8
    $region9: #{counter_example_forward.1} parent=1 // pred_fallthru
      _
    // Predicated region
    $region10: #{counter_example_forward.1} parent=1 // pred_check
      _
    $region11: #{counter_example_forward.1} parent=1 // pred_check_branch
      %35 = sbr.rel (0) target = $region13
    $region12: #{counter_example_forward.1} parent=1 // pred_region
      _
    $region13: #{counter_example_forward.1} parent=1 // pred_fallthru
      _
    // Predicated region
    $region14: #{counter_example_forward.1} parent=1 // pred_check
      _
    $region15: #{counter_example_forward.1} parent=1 // pred_check_branch
      %37 = sbr.rel (0) target = $region17
    $region16: #{counter_example_forward.1} parent=1 // pred_region
      %38 = dma.done [#allocation3], 256
    $region17: #{counter_example_forward.1} parent=1 // pred_fallthru
      _
    // Predicated region
    $region18: #{counter_example_forward.1} parent=1 // pred_check
      _
    $region19: #{counter_example_forward.1} parent=1 // pred_check_branch
      %40 = sbr.rel (0) target = $region21
    $region20: #{counter_example_forward.1} parent=1 // pred_region
      %41 = dma.done [#allocation5], 512
    $region21: #{counter_example_forward.1} parent=1 // pred_fallthru
      _
    %p42 = scmp.eq.s32.totalorder 0, 0
    // Predicated region
    $region22: #{counter_example_forward.1} parent=1 // pred_check
      %p43 = pneg %p42
    $region23: #{counter_example_forward.1} parent=1 // pred_check_branch
      %45 = sbr.rel (%p43) target = $region25
    $region24: #{counter_example_forward.1} parent=1 // pred_region
      %vm46 = vcmask 261120
      %47 = vst.msk [vmem:[%s3] sm:$0xff] %vm46, 0.0
      %48 = vst.msk [vmem:[%s3 + $0x8] sm:$0xff] %vm46, 0.0
    $region25: #{counter_example_forward.1} parent=1 // pred_fallthru
      _
    %v49 = vld [vmem:[#allocation2] sm:$0xff]
    %v50 = vld [vmem:[#allocation2 + $0x8] sm:$0xff]
    %v51 = vld [vmem:[#allocation4] sm:$0xff]
    %v52 = vld [vmem:[#allocation4 + $0x8] sm:$0xff]
    %v53 = vld [vmem:[#allocation4 + $0x10] sm:$0xff]
    %v54 = vld [vmem:[#allocation4 + $0x18] sm:$0xff]
    %v55 = vld [vmem:[%s3] sm:$0xff]
    %v56 = vld [vmem:[%s3 + $0x8] sm:$0xff]
    %vm57 = vcmask 261120
    %v59 = vsel %vm57, %v49, 0
    %v62 = vsel %vm57, %v50, 0
    %64 = vmatprep.subr.mxu0 0.0
    %65 = vmatpush1.msra.mxu0 0.0
    %66 = vmatprep.subr.mxu0 0.0
    %67 = vmatpush1.msra.mxu0 0.0
    %68 = vmatprep.subr.mxu0 0.0
    %69 = vmatpush1.msra.mxu0 0.0
    %70 = vmatprep.subr.mxu0 0.0
    %71 = vmatpush1.msra.mxu0 0.0
    %72 = vmatprep.subr.mxu0 0.0
    %73 = vmatpush1.msra.mxu0 0.0
    %74 = vmatprep.subr.mxu0 0.0
    %75 = vmatpush1.msra.mxu0 0.0
    %76 = vmatprep.subr.mxu0 0.0
    %77 = vmatpush1.msra.mxu0 0.0
    %78 = vmatprep.subr.mxu0 0.0
    %79 = vmatpush1.msra.mxu0 0.0
    %80 = vmatprep.subr.mxu0 0.0
    %81 = vmatpush1.msra.mxu0 0.0
    %82 = vmatprep.subr.mxu0 0.0
    %83 = vmatpush1.msra.mxu0 0.0
    %84 = vmatprep.subr.mxu0 0.0
    %85 = vmatpush1.msra.mxu0 0.0
    %86 = vmatprep.subr.mxu0 0.0
    %87 = vmatpush1.msra.mxu0 0.0
    %88 = vmatprep.subr.mxu0 0.0
    %89 = vmatpush1.msra.mxu0 %v54
    %90 = vmatprep.subr.mxu0 0.0
    %91 = vmatpush1.msra.mxu0 %v53
    %92 = vmatprep.subr.mxu0 0.0
    %93 = vmatpush1.msra.mxu0 %v52
    %94 = vmatprep.subr.mxu0 0.0
    %95 = vmatpush1.msra.mxu0 %v51
    %96 = vmatprep.subr.mxu0 0.0
    %97 = vmatpush2.msra.mxu0 0.0
    %98 = vmatprep.subr.mxu0 0.0
    %99 = vmatpush2.msra.mxu0 0.0
    %100 = vmatprep.subr.mxu0 0.0
    %101 = vmatpush2.msra.mxu0 0.0
    %102 = vmatprep.subr.mxu0 0.0
    %103 = vmatpush2.msra.mxu0 0.0
    %104 = vmatprep.subr.mxu0 0.0
    %105 = vmatpush2.msra.mxu0 0.0
    %106 = vmatprep.subr.mxu0 0.0
    %107 = vmatpush2.msra.mxu0 0.0
    %108 = vmatprep.subr.mxu0 0.0
    %109 = vmatpush2.msra.mxu0 0.0
    %110 = vmatprep.subr.mxu0 0.0
    %111 = vmatpush2.msra.mxu0 0.0
    %112 = vmatprep.subr.mxu0 0.0
    %113 = vmatpush2.msra.mxu0 0.0
    %114 = vmatprep.subr.mxu0 0.0
    %115 = vmatpush2.msra.mxu0 0.0
    %116 = vmatprep.subr.mxu0 0.0
    %117 = vmatpush2.msra.mxu0 0.0
    %118 = vmatprep.subr.mxu0 0.0
    %119 = vmatpush2.msra.mxu0 0.0
    %120 = vmatprep.subr.mxu0 0.0
    %121 = vmatpush2.msra.mxu0 0.0
    %122 = vmatprep.subr.mxu0 0.0
    %123 = vmatpush2.msra.mxu0 0.0
    %124 = vmatprep.subr.mxu0 0.0
    %125 = vmatpush2.msra.mxu0 0.0
    %126 = vmatprep.subr.mxu0 0.0
    %127 = vmatpush2.msra.mxu0 0.0
    %128 = vmatprep.mubr.f32.mxu0 0.0
    %129 = vmatmul.mubr.f32.gmra.mxu0 %v59
    %v130 = vpop.f32.mrf.mxu0
    %v131 = vadd.f32 0.0, %v130
    %v132 = vpop.f32.mrf.mxu0
    %133 = vmatprep.mubr.f32.mxu0 0.0
    %134 = vmatmul.mubr.f32.gmra.mxu0 %v62
    %v135 = vpop.f32.mrf.mxu0
    %v136 = vadd.f32 0.0, %v135
    %v137 = vpop.f32.mrf.mxu0
    %138 = vdwg.mxu0
    %v139 = vadd.f32 %v55, %v131
    %v140 = vadd.f32 %v56, %v136
    %141 = vst.msk [vmem:[%s3] sm:$0xff] %vm57, %v139
    %142 = vst.msk [vmem:[%s3 + $0x8] sm:$0xff] %vm57, %v140
    // Predicated region
    $region26: #{counter_example_forward.1} parent=1 // pred_check
      %p143 = pneg %p42
    $region27: #{counter_example_forward.1} parent=1 // pred_check_branch
      %145 = sbr.rel (%p143) target = $region29
    $region28: #{counter_example_forward.1} parent=1 // pred_region
      %v146 = vld [vmem:[%s3] sm:$0xff]
      %v147 = vld [vmem:[%s3 + $0x8] sm:$0xff]
      %v148 = vld [vmem:[%s2] sm:$0x1]
      %v150 = vlaneseq
      %v151 = vshrl.u32 %v150, 7
      %v152 = vsub.s32 0, %v151
      %v153 = vrot.slane %v148, %v152
      %v155 = vadd.f32 %v146, %v153
      %v156 = vadd.f32 %v147, %v153
      %157 = vst.msk [vmem:[%s3] sm:$0xff] %vm57, %v155
      %158 = vst.msk [vmem:[%s3 + $0x8] sm:$0xff] %vm57, %v156
    $region29: #{counter_example_forward.1} parent=1 // pred_fallthru
      _
    // Predicated region
    $region30: #{counter_example_forward.1} parent=1 // pred_check
      _
    $region31: #{counter_example_forward.1} parent=1 // pred_check_branch
      %160 = sbr.rel (0) target = $region33
    $region32: #{counter_example_forward.1} parent=1 // pred_region
      _
    $region33: #{counter_example_forward.1} parent=1 // pred_fallthru
      _
    // Predicated region
    $region34: #{counter_example_forward.1} parent=1 // pred_check
      _
    $region35: #{counter_example_forward.1} parent=1 // pred_check_branch
      %162 = sbr.rel (0) target = $region37
    $region36: #{counter_example_forward.1} parent=1 // pred_region
      _
    $region37: #{counter_example_forward.1} parent=1 // pred_fallthru
      _
    %163 = vsyncpa [#allocation3], 1
    %164 = vsyncpa [#allocation5], 1

</llo_original>
